<compile_context>
chip_gen: v7x
topology: tpu7x:2x2x1
jax: 0.10.0
libtpu: 0.0.40
codegen_flags: <defaults>
</compile_context>

<pallas_src>
import functools

import jax
import jax.numpy as jnp
from jax.experimental import pallas as pl
from jax.experimental.pallas import tpu as pltpu

NEG_SLOPE = 0.01  # F.leaky_relu default negative_slope


def _leaky_relu(x):
    return jnp.where(x > 0, x, NEG_SLOPE * x)


def _round_up(n, m):
    return ((n + m - 1) // m) * m


def qnetwork_kernel(xa_ref, w_in_ref, b_in_ref, w1_ref, b1_ref, wo_ref, bo_ref,
                    out_ref):
    xa = xa_ref[...]                                        # (TILE_B, state+action)

    # Fused fc_s/fc_a: block-diagonal W_in gives h = [h1 | h2] in one matmul.
    h = _leaky_relu(
        jnp.dot(xa, w_in_ref[...], preferred_element_type=jnp.float32)
        + b_in_ref[...]
    )

    # fc_1 on the full 64-wide hidden state (single MXU push).
    q = _leaky_relu(
        jnp.dot(h.astype(w1_ref.dtype), w1_ref[...],
                preferred_element_type=jnp.float32)
        + b1_ref[...]
    )

    # fc_out (no activation).
    q = (
        jnp.dot(q.astype(wo_ref.dtype), wo_ref[...],
                preferred_element_type=jnp.float32)
        + bo_ref[...]
    )
    out_ref[...] = q.astype(out_ref.dtype)


def prepare_params(params, compute_dtype):
    """Pack nn.Linear-style params into the fused layout the kernel expects."""
    ws, wa = params["ws"], params["wa"]          # (state_dim, 32), (action_dim, 32)
    state_dim, h = ws.shape
    action_dim = wa.shape[0]
    w_in = jnp.zeros((state_dim + action_dim, 2 * h), jnp.float32)
    w_in = w_in.at[:state_dim, :h].set(ws)
    w_in = w_in.at[state_dim:, h:].set(wa)
    return {
        "w_in": w_in.astype(compute_dtype),
        "b_in": jnp.concatenate([params["bs"], params["ba"]])
                  .reshape(1, 2 * h).astype(jnp.float32),
        "w1": params["w1"].astype(compute_dtype),
        "b1": params["b1"].reshape(1, -1).astype(jnp.float32),
        "wo": params["wo"].astype(compute_dtype),
        "bo": params["bo"].reshape(1, -1).astype(jnp.float32),
    }


@functools.partial(jax.jit, static_argnames=("tile_b", "compute_dtype"))
def qnetwork_forward(x, a, params, *, tile_b=512, compute_dtype=jnp.bfloat16):
    """x: (B, state_dim), a: (B, action_dim) -> q: (B, action_dim) in float32."""
    B = x.shape[0]
    p = prepare_params(params, compute_dtype)
    in_dim = p["w_in"].shape[0]
    action_dim = p["wo"].shape[1]

    xa = jnp.concatenate([x, a], axis=-1).astype(compute_dtype)   # (B, in_dim)

    # Batch tiling: keep the tile sublane-aligned (multiple of 8) and don't
    # over-pad tiny batches; pad the tail so B_pad % tile_b == 0.
    tile_b = min(tile_b, _round_up(B, 8))
    b_pad = _round_up(B, tile_b)
    if b_pad != B:
        xa = jnp.pad(xa, ((0, b_pad - B), (0, 0)))

    batch_map = lambda i: (i, 0)
    const_map = lambda i: (0, 0)   # weights resident in VMEM across grid steps
    weight_specs = [
        pl.BlockSpec(p[name].shape, const_map)
        for name in ("w_in", "b_in", "w1", "b1", "wo", "bo")
    ]

    out = pl.pallas_call(
        qnetwork_kernel,
        out_shape=jax.ShapeDtypeStruct((b_pad, action_dim), jnp.float32),
        grid=(b_pad // tile_b,),
        in_specs=[pl.BlockSpec((tile_b, in_dim), batch_map)] + weight_specs,
        out_specs=pl.BlockSpec((tile_b, action_dim), batch_map),
        compiler_params=pltpu.CompilerParams(
            dimension_semantics=("parallel",),   # megacore sharding on v7x
        ),
    )(xa, p["w_in"], p["b_in"], p["w1"], p["b1"], p["wo"], p["bo"])

    return out[:B]


def init_params(key, state_dim, action_dim):
    """Deterministic synthetic parameters (shapes match the nn.Linear layers,
    stored as (in_features, out_features) so y = x @ W + b)."""
    ks = jax.random.split(key, 8)

    def uniform(k, shape, fan_in):
        bound = 1.0 / jnp.sqrt(jnp.float32(fan_in))
        return jax.random.uniform(k, shape, jnp.float32, -bound, bound)

    return {
        "ws": uniform(ks[0], (state_dim, 32), state_dim),
        "bs": uniform(ks[1], (32,), state_dim),
        "wa": uniform(ks[2], (action_dim, 32), action_dim),
        "ba": uniform(ks[3], (32,), action_dim),
        "w1": uniform(ks[4], (64, 64), 64),
        "b1": uniform(ks[5], (64,), 64),
        "wo": uniform(ks[6], (64, action_dim), 64),
        "bo": uniform(ks[7], (action_dim,), 64),
    }


def qnetwork_reference(x, a, params):
    """Plain-JAX (f32) reference matching the PyTorch forward."""
    h1 = _leaky_relu(x @ params["ws"] + params["bs"])
    h2 = _leaky_relu(a @ params["wa"] + params["ba"])
    cat = jnp.concatenate([h1, h2], axis=-1)
    q = _leaky_relu(cat @ params["w1"] + params["b1"])
    return q @ params["wo"] + params["bo"]


if __name__ == "__main__":
    key = jax.random.PRNGKey(0)
    k_p, k_x, k_a = jax.random.split(key, 3)

    batch, state_dim, action_dim = 8, 3, 1  # pendulum-like dims
    params = init_params(k_p, state_dim, action_dim)
    x = jax.random.normal(k_x, (batch, state_dim), jnp.float32)
    a = jax.random.normal(k_a, (batch, action_dim), jnp.float32)

    q_ref = qnetwork_reference(x, a, params)

    # Exact-semantics check (f32 compute path, tight tolerance).
    q32 = jax.block_until_ready(
        qnetwork_forward(x, a, params, compute_dtype=jnp.float32))
    assert q32.shape == (batch, action_dim)
    assert jnp.allclose(q32, q_ref, atol=1e-5, rtol=1e-5), "mismatch (f32 path)"

    # Default bf16 path (f32 accumulation) — loosened tolerance.
    q = jax.block_until_ready(qnetwork_forward(x, a, params))
    assert q.shape == (batch, action_dim)
    assert jnp.allclose(q, q_ref, atol=5e-2, rtol=5e-2), "mismatch (bf16 path)"

    # Exercise the batch grid + tail-padding path (B not divisible by tile).
    B2 = 1000
    x2 = jax.random.normal(k_x, (B2, state_dim), jnp.float32)
    a2 = jax.random.normal(k_a, (B2, action_dim), jnp.float32)
    q2 = jax.block_until_ready(qnetwork_forward(x2, a2, params, tile_b=256))
    q2_ref = qnetwork_reference(x2, a2, params)
    assert q2.shape == (B2, action_dim)
    assert jnp.allclose(q2, q2_ref, atol=5e-2, rtol=5e-2), "mismatch (batched)"

    print("KERNEL_OK")
</pallas_src>

<mosaic_0001>
module attributes {stable_mosaic.version = 11 : i64} {
  func.func @qnetwork_kernel(%arg0: i32, %arg1: memref<8x4xf32, #tpu.memory_space<vmem>>, %arg2: memref<4x64xf32, #tpu.memory_space<vmem>>, %arg3: memref<1x64xf32, #tpu.memory_space<vmem>>, %arg4: memref<64x64xf32, #tpu.memory_space<vmem>>, %arg5: memref<1x64xf32, #tpu.memory_space<vmem>>, %arg6: memref<64x1xf32, #tpu.memory_space<vmem>>, %arg7: memref<1x1xf32, #tpu.memory_space<vmem>>, %arg8: memref<8x1xf32, #tpu.memory_space<vmem>>) attributes {dimension_semantics = [#tpu.dimension_semantics<parallel>], iteration_bounds = array<i64: 1>, scalar_prefetch = 0 : i64, scratch_operands = 0 : i64, tpu.core_type = #tpu.core_type<tc>, window_params = [{transform_indices = @transform_0, window_bounds = array<i64: 8, 4>}, {pipeline_mode = #tpu.pipeline_mode<synchronous>, transform_indices = @transform_1, window_bounds = array<i64: 4, 64>}, {pipeline_mode = #tpu.pipeline_mode<synchronous>, transform_indices = @transform_2, window_bounds = array<i64: 1, 64>}, {pipeline_mode = #tpu.pipeline_mode<synchronous>, transform_indices = @transform_3, window_bounds = array<i64: 64, 64>}, {pipeline_mode = #tpu.pipeline_mode<synchronous>, transform_indices = @transform_4, window_bounds = array<i64: 1, 64>}, {pipeline_mode = #tpu.pipeline_mode<synchronous>, transform_indices = @transform_5, window_bounds = array<i64: 64, 1>}, {pipeline_mode = #tpu.pipeline_mode<synchronous>, transform_indices = @transform_6, window_bounds = array<i64: 1, 1>}, {transform_indices = @transform_7, window_bounds = array<i64: 8, 1>}]} {
    %c0 = arith.constant 0 : index
    %c0_0 = arith.constant 0 : index
    %0 = vector.load %arg1[%c0, %c0_0] : memref<8x4xf32, #tpu.memory_space<vmem>>, vector<8x4xf32>
    %c0_1 = arith.constant 0 : index
    %c0_2 = arith.constant 0 : index
    %1 = vector.load %arg2[%c0_1, %c0_2] : memref<4x64xf32, #tpu.memory_space<vmem>>, vector<4x64xf32>
    %cst = arith.constant dense<0.000000e+00> : vector<8x64xf32>
    %2 = tpu.matmul %0, %1, %cst {dimension_numbers = #tpu.dot_dimension_numbers<[1], [0], [0], [1], [0, 0, 1, 1], [], []>} : vector<8x4xf32>, vector<4x64xf32>, vector<8x64xf32> -> vector<8x64xf32>
    %c0_3 = arith.constant 0 : index
    %c0_4 = arith.constant 0 : index
    %3 = vector.load %arg3[%c0_3, %c0_4] : memref<1x64xf32, #tpu.memory_space<vmem>>, vector<1x64xf32>
    %4 = vector.broadcast %3 : vector<1x64xf32> to vector<8x64xf32>
    %5 = arith.addf %2, %4 : vector<8x64xf32>
    %cst_5 = arith.constant 0.000000e+00 : f32
    %6 = vector.broadcast %cst_5 : f32 to vector<8x64xf32>
    %7 = arith.cmpf ogt, %5, %6 : vector<8x64xf32>
    %cst_6 = arith.constant 0.00999999977 : f32
    %8 = vector.broadcast %cst_6 : f32 to vector<8x64xf32>
    %9 = arith.mulf %8, %5 : vector<8x64xf32>
    %10 = arith.select %7, %5, %9 : vector<8x64xi1>, vector<8x64xf32>
    %c0_7 = arith.constant 0 : index
    %c0_8 = arith.constant 0 : index
    %11 = vector.load %arg4[%c0_7, %c0_8] : memref<64x64xf32, #tpu.memory_space<vmem>>, vector<64x64xf32>
    %cst_9 = arith.constant dense<0.000000e+00> : vector<8x64xf32>
    %12 = tpu.matmul %10, %11, %cst_9 {dimension_numbers = #tpu.dot_dimension_numbers<[1], [0], [0], [1], [0, 0, 1, 1], [], []>} : vector<8x64xf32>, vector<64x64xf32>, vector<8x64xf32> -> vector<8x64xf32>
    %c0_10 = arith.constant 0 : index
    %c0_11 = arith.constant 0 : index
    %13 = vector.load %arg5[%c0_10, %c0_11] : memref<1x64xf32, #tpu.memory_space<vmem>>, vector<1x64xf32>
    %14 = vector.broadcast %13 : vector<1x64xf32> to vector<8x64xf32>
    %15 = arith.addf %12, %14 : vector<8x64xf32>
    %cst_12 = arith.constant 0.000000e+00 : f32
    %16 = vector.broadcast %cst_12 : f32 to vector<8x64xf32>
    %17 = arith.cmpf ogt, %15, %16 : vector<8x64xf32>
    %cst_13 = arith.constant 0.00999999977 : f32
    %18 = vector.broadcast %cst_13 : f32 to vector<8x64xf32>
    %19 = arith.mulf %18, %15 : vector<8x64xf32>
    %20 = arith.select %17, %15, %19 : vector<8x64xi1>, vector<8x64xf32>
    %c0_14 = arith.constant 0 : index
    %c0_15 = arith.constant 0 : index
    %21 = vector.load %arg6[%c0_14, %c0_15] : memref<64x1xf32, #tpu.memory_space<vmem>>, vector<64x1xf32>
    %cst_16 = arith.constant dense<0.000000e+00> : vector<8x1xf32>
    %22 = tpu.matmul %20, %21, %cst_16 {dimension_numbers = #tpu.dot_dimension_numbers<[1], [0], [0], [1], [0, 0, 1, 1], [], []>} : vector<8x64xf32>, vector<64x1xf32>, vector<8x1xf32> -> vector<8x1xf32>
    %c0_17 = arith.constant 0 : index
    %c0_18 = arith.constant 0 : index
    %23 = vector.load %arg7[%c0_17, %c0_18] : memref<1x1xf32, #tpu.memory_space<vmem>>, vector<1x1xf32>
    %24 = vector.broadcast %23 : vector<1x1xf32> to vector<8x1xf32>
    %25 = arith.addf %22, %24 : vector<8x1xf32>
    %c0_19 = arith.constant 0 : index
    %c0_20 = arith.constant 0 : index
    %26 = vector.load %arg8[%c0_19, %c0_20] : memref<8x1xf32, #tpu.memory_space<vmem>>, vector<8x1xf32>
    tpu.vector_store %arg8[%c0_19, %c0_20], %25 {strides = array<i32>} : memref<8x1xf32, #tpu.memory_space<vmem>>, vector<8x1xf32>,
    return
  }
  func.func @transform_0(%arg0: i32) -> (i32, i32) {
    %c0_i32 = arith.constant 0 : i32
    %c0_i32_0 = arith.constant 0 : i32
    return %arg0, %c0_i32 : i32, i32
  }
  func.func @transform_1(%arg0: i32) -> (i32, i32) {
    %c0_i32 = arith.constant 0 : i32
    %c0_i32_0 = arith.constant 0 : i32
    %c0_i32_1 = arith.constant 0 : i32
    return %c0_i32, %c0_i32_0 : i32, i32
  }
  func.func @transform_2(%arg0: i32) -> (i32, i32) {
    %c0_i32 = arith.constant 0 : i32
    %c0_i32_0 = arith.constant 0 : i32
    %c0_i32_1 = arith.constant 0 : i32
    return %c0_i32, %c0_i32_0 : i32, i32
  }
  func.func @transform_3(%arg0: i32) -> (i32, i32) {
    %c0_i32 = arith.constant 0 : i32
    %c0_i32_0 = arith.constant 0 : i32
    %c0_i32_1 = arith.constant 0 : i32
    return %c0_i32, %c0_i32_0 : i32, i32
  }
  func.func @transform_4(%arg0: i32) -> (i32, i32) {
    %c0_i32 = arith.constant 0 : i32
    %c0_i32_0 = arith.constant 0 : i32
    %c0_i32_1 = arith.constant 0 : i32
    return %c0_i32, %c0_i32_0 : i32, i32
  }
  func.func @transform_5(%arg0: i32) -> (i32, i32) {
    %c0_i32 = arith.constant 0 : i32
    %c0_i32_0 = arith.constant 0 : i32
    %c0_i32_1 = arith.constant 0 : i32
    return %c0_i32, %c0_i32_0 : i32, i32
  }
  func.func @transform_6(%arg0: i32) -> (i32, i32) {
    %c0_i32 = arith.constant 0 : i32
    %c0_i32_0 = arith.constant 0 : i32
    %c0_i32_1 = arith.constant 0 : i32
    return %c0_i32, %c0_i32_0 : i32, i32
  }
  func.func @transform_7(%arg0: i32) -> (i32, i32) {
    %c0_i32 = arith.constant 0 : i32
    %c0_i32_0 = arith.constant 0 : i32
    return %arg0, %c0_i32 : i32, i32
  }
}

</mosaic_0001>

<llo_original>
// kernel: qnetwork_forward.1
$region0: #{qnetwork_forward.1}
  #allocation0 [shape = 'u32[]', space=smem, size = 0x4, offset = 0x4, fixed_abs, tag = 'smem constant byte address 0x4 - core index']
  #allocation1 [shape = 'u32[144,128]{1,0:T(1,128)}', space=vmem, size = 0x12000, scoped, tag = 'internal scratch']
  #allocation2 [shape = 'f32[1,1]{1,0:T(1,128)S(1)}', space=vmem, size = 0x200, scoped, tag = 'scoped memory for qnetwork_forward.1']
  %s0 = inlined_call_operand.vmem [shape: f32[8,4], index: 0, kind: input, shape index: {}]
  %s1 = inlined_call_operand.vmem [shape: f32[4,64], index: 1, kind: input, shape index: {}]
  %s2 = inlined_call_operand.vmem [shape: f32[1,64], index: 2, kind: input, shape index: {}]
  %s3 = inlined_call_operand.vmem [shape: f32[64,64], index: 3, kind: input, shape index: {}]
  %s4 = inlined_call_operand.vmem [shape: f32[1,64], index: 4, kind: input, shape index: {}]
  %s5 = inlined_call_operand.vmem [shape: f32[64,1], index: 5, kind: input, shape index: {}]
  %s6 = inlined_call_operand.<no memory space> [shape: f32[1,1], index: 6, kind: input, shape index: {}]
  %s7 = inlined_call_operand.vmem [shape: f32[8,1], index: 7, kind: output, shape index: {}]
  %s8 = sld [smem:[#allocation0]]
  $region38: #{qnetwork_forward.1} parent=0
    _
  %s10 = ssub.s32 1, %s8
  %s11 = scalar_select 0, %s10, %s8
  %v12 = vstv %s6
  %13 = vst [vmem:[#allocation2] sm:$0x1] %v12
  // Predicated region
  $region2: #{qnetwork_forward.1} parent=0 // pred_check
    _
  $region3: #{qnetwork_forward.1} parent=0 // pred_check_branch
    %15 = sbr.rel (0) target = $region5
  $region4: #{qnetwork_forward.1} parent=0 // pred_region
    _
  $region5: #{qnetwork_forward.1} parent=0 // pred_fallthru
    _
  // Predicated region
  $region6: #{qnetwork_forward.1} parent=0 // pred_check
    _
  $region7: #{qnetwork_forward.1} parent=0 // pred_check_branch
    %17 = sbr.rel (0) target = $region9
  $region8: #{qnetwork_forward.1} parent=0 // pred_region
    _
  $region9: #{qnetwork_forward.1} parent=0 // pred_fallthru
    _
  // Predicated region
  $region10: #{qnetwork_forward.1} parent=0 // pred_check
    _
  $region11: #{qnetwork_forward.1} parent=0 // pred_check_branch
    %19 = sbr.rel (0) target = $region13
  $region12: #{qnetwork_forward.1} parent=0 // pred_region
    _
  $region13: #{qnetwork_forward.1} parent=0 // pred_fallthru
    _
  // Predicated region
  $region14: #{qnetwork_forward.1} parent=0 // pred_check
    _
  $region15: #{qnetwork_forward.1} parent=0 // pred_check_branch
    %21 = sbr.rel (0) target = $region17
  $region16: #{qnetwork_forward.1} parent=0 // pred_region
    _
  $region17: #{qnetwork_forward.1} parent=0 // pred_fallthru
    _
  // Predicated region
  $region18: #{qnetwork_forward.1} parent=0 // pred_check
    _
  $region19: #{qnetwork_forward.1} parent=0 // pred_check_branch
    %23 = sbr.rel (0) target = $region21
  $region20: #{qnetwork_forward.1} parent=0 // pred_region
    _
  $region21: #{qnetwork_forward.1} parent=0 // pred_fallthru
    _
  // Predicated region
  $region22: #{qnetwork_forward.1} parent=0 // pred_check
    _
  $region23: #{qnetwork_forward.1} parent=0 // pred_check_branch
    %25 = sbr.rel (0) target = $region25
  $region24: #{qnetwork_forward.1} parent=0 // pred_region
    _
  $region25: #{qnetwork_forward.1} parent=0 // pred_fallthru
    _
  // Predicated region
  $region26: #{qnetwork_forward.1} parent=0 // pred_check
    _
  $region27: #{qnetwork_forward.1} parent=0 // pred_check_branch
    %27 = sbr.rel (0) target = $region29
  $region28: #{qnetwork_forward.1} parent=0 // pred_region
    _
  $region29: #{qnetwork_forward.1} parent=0 // pred_fallthru
    _
  %v28 = vld [vmem:[%s0] sm:$0xff]
  %v29 = vld [vmem:[%s1] sm:$0xf]
  %v30 = vld [vmem:[%s2] sm:$0x1]
  %v32 = vlaneseq
  %v33 = vshrl.u32 %v32, 7
  %v34 = vsub.s32 0, %v33
  %v35 = vrot.slane %v30, %v34
  %vm37 = vcmask 31744
  %v39 = vsel %vm37, %v28, 0
  %vm41 = vcmask 1043456
  %v43 = vsel %vm41, %v29, 0
  %45 = vmatprep.subr.mxu0 0.0
  %46 = vmatpush1.msra.mxu0 %v43
  %47 = vmatprep.subr.mxu0 0.0
  %48 = vmatpush1.msra.mxu0 0.0
  %49 = vmatprep.subr.mxu0 0.0
  %50 = vmatpush1.msra.mxu0 0.0
  %51 = vmatprep.subr.mxu0 0.0
  %52 = vmatpush1.msra.mxu0 0.0
  %53 = vmatprep.subr.mxu0 0.0
  %54 = vmatpush1.msra.mxu0 0.0
  %55 = vmatprep.subr.mxu0 0.0
  %56 = vmatpush1.msra.mxu0 0.0
  %57 = vmatprep.subr.mxu0 0.0
  %58 = vmatpush1.msra.mxu0 0.0
  %59 = vmatprep.subr.mxu0 0.0
  %60 = vmatpush1.msra.mxu0 0.0
  %61 = vmatprep.subr.mxu0 0.0
  %62 = vmatpush1.msra.mxu0 0.0
  %63 = vmatprep.subr.mxu0 0.0
  %64 = vmatpush1.msra.mxu0 0.0
  %65 = vmatprep.subr.mxu0 0.0
  %66 = vmatpush1.msra.mxu0 0.0
  %67 = vmatprep.subr.mxu0 0.0
  %68 = vmatpush1.msra.mxu0 0.0
  %69 = vmatprep.subr.mxu0 0.0
  %70 = vmatpush1.msra.mxu0 0.0
  %71 = vmatprep.subr.mxu0 0.0
  %72 = vmatpush1.msra.mxu0 0.0
  %73 = vmatprep.subr.mxu0 0.0
  %74 = vmatpush1.msra.mxu0 0.0
  %75 = vmatprep.subr.mxu0 0.0
  %76 = vmatpush1.msra.mxu0 0.0
  %77 = vmatprep.subr.mxu0 0.0
  %78 = vmatpush1.msra.mxu0 0.0
  %79 = vmatprep.subr.mxu0 0.0
  %80 = vmatpush1.msra.mxu0 0.0
  %81 = vmatprep.subr.mxu0 0.0
  %82 = vmatpush1.msra.mxu0 0.0
  %83 = vmatprep.subr.mxu0 0.0
  %84 = vmatpush1.msra.mxu0 0.0
  %85 = vmatprep.subr.mxu0 0.0
  %86 = vmatpush1.msra.mxu0 0.0
  %87 = vmatprep.subr.mxu0 0.0
  %88 = vmatpush1.msra.mxu0 0.0
  %89 = vmatprep.subr.mxu0 0.0
  %90 = vmatpush1.msra.mxu0 0.0
  %91 = vmatprep.subr.mxu0 0.0
  %92 = vmatpush1.msra.mxu0 0.0
  %93 = vmatprep.subr.mxu0 0.0
  %94 = vmatpush1.msra.mxu0 0.0
  %95 = vmatprep.subr.mxu0 0.0
  %96 = vmatpush1.msra.mxu0 0.0
  %97 = vmatprep.subr.mxu0 0.0
  %98 = vmatpush1.msra.mxu0 0.0
  %99 = vmatprep.subr.mxu0 0.0
  %100 = vmatpush1.msra.mxu0 0.0
  %101 = vmatprep.subr.mxu0 0.0
  %102 = vmatpush1.msra.mxu0 0.0
  %103 = vmatprep.subr.mxu0 0.0
  %104 = vmatpush1.msra.mxu0 0.0
  %105 = vmatprep.subr.mxu0 0.0
  %106 = vmatpush1.msra.mxu0 0.0
  %107 = vmatprep.subr.mxu0 0.0
  %108 = vmatpush1.msra.mxu0 0.0
  %109 = vmatprep.mubr.f32.mxu0 0.0
  %110 = vmatmul.mubr.f32.gmra.mrb[0].mxu0 %v39
  %v111 = vpop.f32.mrb[0].mxu0
  %v112 = vadd.f32 %v35, %v111
  %v113 = vpop.f32.mrb[0].mxu0
  %114 = vdwg.mxu0
  %vm115 = vcmp.gt.f32.partialorder %v112, 0.0
  %v116 = vmul.f32 %v112, 0.01
  %v117 = vsel %vm115, %v112, %v116
  %v118 = vld [vmem:[%s3] sm:$0xff]
  %v119 = vld [vmem:[%s3 + $0x8] sm:$0xff]
  %v120 = vld [vmem:[%s3 + $0x10] sm:$0xff]
  %v121 = vld [vmem:[%s3 + $0x18] sm:$0xff]
  %v122 = vld [vmem:[%s3 + $0x20] sm:$0xff]
  %v123 = vld [vmem:[%s3 + $0x28] sm:$0xff]
  %v124 = vld [vmem:[%s3 + $0x30] sm:$0xff]
  %v125 = vld [vmem:[%s3 + $0x38] sm:$0xff]
  %v126 = vld [vmem:[%s4] sm:$0x1]
  %v128 = vlaneseq
  %v129 = vshrl.u32 %v128, 7
  %v130 = vsub.s32 0, %v129
  %v131 = vrot.slane %v126, %v130
  %vm133 = vcmask 523264
  %v135 = vsel %vm133, %v117, 0
  %137 = vmatprep.subr.mxu0 0.0
  %138 = vmatpush1.msra.mxu0 %v118
  %139 = vmatprep.subr.mxu0 0.0
  %140 = vmatpush1.msra.mxu0 %v119
  %141 = vmatprep.subr.mxu0 0.0
  %142 = vmatpush1.msra.mxu0 %v120
  %143 = vmatprep.subr.mxu0 0.0
  %144 = vmatpush1.msra.mxu0 %v121
  %145 = vmatprep.subr.mxu0 0.0
  %146 = vmatpush1.msra.mxu0 %v122
  %147 = vmatprep.subr.mxu0 0.0
  %148 = vmatpush1.msra.mxu0 %v123
  %149 = vmatprep.subr.mxu0 0.0
  %150 = vmatpush1.msra.mxu0 %v124
  %151 = vmatprep.subr.mxu0 0.0
  %152 = vmatpush1.msra.mxu0 %v125
  %153 = vmatprep.subr.mxu0 0.0
  %154 = vmatpush1.msra.mxu0 0.0
  %155 = vmatprep.subr.mxu0 0.0
  %156 = vmatpush1.msra.mxu0 0.0
  %157 = vmatprep.subr.mxu0 0.0
  %158 = vmatpush1.msra.mxu0 0.0
  %159 = vmatprep.subr.mxu0 0.0
  %160 = vmatpush1.msra.mxu0 0.0
  %161 = vmatprep.subr.mxu0 0.0
  %162 = vmatpush1.msra.mxu0 0.0
  %163 = vmatprep.subr.mxu0 0.0
  %164 = vmatpush1.msra.mxu0 0.0
  %165 = vmatprep.subr.mxu0 0.0
  %166 = vmatpush1.msra.mxu0 0.0
  %167 = vmatprep.subr.mxu0 0.0
  %168 = vmatpush1.msra.mxu0 0.0
  %169 = vmatprep.subr.mxu0 0.0
  %170 = vmatpush1.msra.mxu0 0.0
  %171 = vmatprep.subr.mxu0 0.0
  %172 = vmatpush1.msra.mxu0 0.0
  %173 = vmatprep.subr.mxu0 0.0
  %174 = vmatpush1.msra.mxu0 0.0
  %175 = vmatprep.subr.mxu0 0.0
  %176 = vmatpush1.msra.mxu0 0.0
  %177 = vmatprep.subr.mxu0 0.0
  %178 = vmatpush1.msra.mxu0 0.0
  %179 = vmatprep.subr.mxu0 0.0
  %180 = vmatpush1.msra.mxu0 0.0
  %181 = vmatprep.subr.mxu0 0.0
  %182 = vmatpush1.msra.mxu0 0.0
  %183 = vmatprep.subr.mxu0 0.0
  %184 = vmatpush1.msra.mxu0 0.0
  %185 = vmatprep.subr.mxu0 0.0
  %186 = vmatpush1.msra.mxu0 0.0
  %187 = vmatprep.subr.mxu0 0.0
  %188 = vmatpush1.msra.mxu0 0.0
  %189 = vmatprep.subr.mxu0 0.0
  %190 = vmatpush1.msra.mxu0 0.0
  %191 = vmatprep.subr.mxu0 0.0
  %192 = vmatpush1.msra.mxu0 0.0
  %193 = vmatprep.subr.mxu0 0.0
  %194 = vmatpush1.msra.mxu0 0.0
  %195 = vmatprep.subr.mxu0 0.0
  %196 = vmatpush1.msra.mxu0 0.0
  %197 = vmatprep.subr.mxu0 0.0
  %198 = vmatpush1.msra.mxu0 0.0
  %199 = vmatprep.subr.mxu0 0.0
  %200 = vmatpush1.msra.mxu0 0.0
  %201 = vmatprep.mubr.f32.mxu0 0.0
  %202 = vmatmul.mubr.f32.gmra.mrb[0].mxu0 %v135
  %v203 = vpop.f32.mrb[0].mxu0
  %v204 = vadd.f32 %v131, %v203
  %v205 = vpop.f32.mrb[0].mxu0
  %206 = vdwg.mxu0
  %vm207 = vcmp.gt.f32.partialorder %v204, 0.0
  %v208 = vmul.f32 %v204, 0.01
  %v209 = vsel %vm207, %v204, %v208
  %v210 = vld [vmem:[%s5] sm:$0xff]
  %v211 = vld [vmem:[%s5 + $0x8] sm:$0xff]
  %v212 = vld [vmem:[%s5 + $0x10] sm:$0xff]
  %v213 = vld [vmem:[%s5 + $0x18] sm:$0xff]
  %v214 = vld [vmem:[%s5 + $0x20] sm:$0xff]
  %v215 = vld [vmem:[%s5 + $0x28] sm:$0xff]
  %v216 = vld [vmem:[%s5 + $0x30] sm:$0xff]
  %v217 = vld [vmem:[%s5 + $0x38] sm:$0xff]
  %v218 = vld [vmem:[#allocation2] sm:$0x1]
  %v220 = vlaneseq
  %v221 = vshrl.u32 %v220, 7
  %v222 = vsub.s32 0, %v221
  %v223 = vrot.slane %v218, %v222
  %v226 = vsel %vm133, %v209, 0
  %228 = vmatprep.subr.mxu0 0.0
  %229 = vmatpush1.msra.mxu0 %v210
  %230 = vmatprep.subr.mxu0 0.0
  %231 = vmatpush1.msra.mxu0 %v211
  %232 = vmatprep.subr.mxu0 0.0
  %233 = vmatpush1.msra.mxu0 %v212
  %234 = vmatprep.subr.mxu0 0.0
  %235 = vmatpush1.msra.mxu0 %v213
  %236 = vmatprep.subr.mxu0 0.0
  %237 = vmatpush1.msra.mxu0 %v214
  %238 = vmatprep.subr.mxu0 0.0
  %239 = vmatpush1.msra.mxu0 %v215
  %240 = vmatprep.subr.mxu0 0.0
  %241 = vmatpush1.msra.mxu0 %v216
  %242 = vmatprep.subr.mxu0 0.0
  %243 = vmatpush1.msra.mxu0 %v217
  %244 = vmatprep.subr.mxu0 0.0
  %245 = vmatpush1.msra.mxu0 0.0
  %246 = vmatprep.subr.mxu0 0.0
  %247 = vmatpush1.msra.mxu0 0.0
  %248 = vmatprep.subr.mxu0 0.0
  %249 = vmatpush1.msra.mxu0 0.0
  %250 = vmatprep.subr.mxu0 0.0
  %251 = vmatpush1.msra.mxu0 0.0
  %252 = vmatprep.subr.mxu0 0.0
  %253 = vmatpush1.msra.mxu0 0.0
  %254 = vmatprep.subr.mxu0 0.0
  %255 = vmatpush1.msra.mxu0 0.0
  %256 = vmatprep.subr.mxu0 0.0
  %257 = vmatpush1.msra.mxu0 0.0
  %258 = vmatprep.subr.mxu0 0.0
  %259 = vmatpush1.msra.mxu0 0.0
  %260 = vmatprep.subr.mxu0 0.0
  %261 = vmatpush1.msra.mxu0 0.0
  %262 = vmatprep.subr.mxu0 0.0
  %263 = vmatpush1.msra.mxu0 0.0
  %264 = vmatprep.subr.mxu0 0.0
  %265 = vmatpush1.msra.mxu0 0.0
  %266 = vmatprep.subr.mxu0 0.0
  %267 = vmatpush1.msra.mxu0 0.0
  %268 = vmatprep.subr.mxu0 0.0
  %269 = vmatpush1.msra.mxu0 0.0
  %270 = vmatprep.subr.mxu0 0.0
  %271 = vmatpush1.msra.mxu0 0.0
  %272 = vmatprep.subr.mxu0 0.0
  %273 = vmatpush1.msra.mxu0 0.0
  %274 = vmatprep.subr.mxu0 0.0
  %275 = vmatpush1.msra.mxu0 0.0
  %276 = vmatprep.subr.mxu0 0.0
  %277 = vmatpush1.msra.mxu0 0.0
  %278 = vmatprep.subr.mxu0 0.0
  %279 = vmatpush1.msra.mxu0 0.0
  %280 = vmatprep.subr.mxu0 0.0
  %281 = vmatpush1.msra.mxu0 0.0
  %282 = vmatprep.subr.mxu0 0.0
  %283 = vmatpush1.msra.mxu0 0.0
  %284 = vmatprep.subr.mxu0 0.0
  %285 = vmatpush1.msra.mxu0 0.0
  %286 = vmatprep.subr.mxu0 0.0
  %287 = vmatpush1.msra.mxu0 0.0
  %288 = vmatprep.subr.mxu0 0.0
  %289 = vmatpush1.msra.mxu0 0.0
  %290 = vmatprep.subr.mxu0 0.0
  %291 = vmatpush1.msra.mxu0 0.0
  %292 = vmatprep.mubr.f32.mxu0 0.0
  %293 = vmatmul.mubr.f32.gmra.mrb[0].mxu0 %v226
  %v294 = vpop.f32.mrb[0].mxu0
  %v295 = vadd.f32 %v223, %v294
  %v296 = vpop.f32.mrb[0].mxu0
  %297 = vdwg.mxu0
  %vm298 = vcmask 7168
  %299 = vst.msk [vmem:[%s7] sm:$0xff] %vm298, %v295
  // Predicated region
  $region30: #{qnetwork_forward.1} parent=0 // pred_check
    _
  $region31: #{qnetwork_forward.1} parent=0 // pred_check_branch
    %301 = sbr.rel (0) target = $region33
  $region32: #{qnetwork_forward.1} parent=0 // pred_region
    _
  $region33: #{qnetwork_forward.1} parent=0 // pred_fallthru
    _
  // Predicated region
  $region34: #{qnetwork_forward.1} parent=0 // pred_check
    _
  $region35: #{qnetwork_forward.1} parent=0 // pred_check_branch
    %303 = sbr.rel (0) target = $region37
  $region36: #{qnetwork_forward.1} parent=0 // pred_region
    _
  $region37: #{qnetwork_forward.1} parent=0 // pred_fallthru
    _

</llo_original>
